<compile_context>
chip_gen: v7x
topology: tpu7x:2x2x1
jax: 0.10.0
libtpu: 0.0.40
codegen_flags: <defaults>
</compile_context>

<pallas_src>
import math

import jax
import jax.numpy as jnp
from jax.experimental import pallas as pl
from jax.experimental.pallas import tpu as pltpu

# "Parameters" mirroring the module __init__ (nonzero so both smoothness branches run).
MAG_SMOOTH_WEIGHT = 0.1
PHASE_SMOOTH_WEIGHT = 0.1
PI = math.pi


def _round_up(x, m):
    return ((x + m - 1) // m) * m


def _make_kernel(mag_w, phase_w, B, TB, half):
    """Per-tile kernel; weights/shapes baked in at trace time."""
    inv_pw = 1.0 / float(B * half)          # Huber & circular means share this divisor
    inv_sm = 1.0 / float(B * (half - 2))    # both smoothness means share this divisor
    needs_row_mask = (B % TB) != 0          # only the tail tile ever needs masking

    def kernel(pred_ref, tgt_ref, out_ref):
        # Static column views of the whole (TB, C) tile; lane-aligned when half%128==0.
        # Upcast in-kernel so bf16 inputs can stream at half the HBM bytes.
        pm = pred_ref[:, pl.ds(0, half)].astype(jnp.float32)      # magnitude (linear)
        pp = pred_ref[:, pl.ds(half, half)].astype(jnp.float32)   # phase
        tm_db = tgt_ref[:, pl.ds(0, half)].astype(jnp.float32)    # target magnitude (dB)
        tp = tgt_ref[:, pl.ds(half, half)].astype(jnp.float32)    # target phase

        col = jax.lax.broadcasted_iota(jnp.int32, (TB, half), 1)
        if needs_row_mask:
            row = (jax.lax.broadcasted_iota(jnp.int32, (TB, half), 0)
                   + pl.program_id(0) * TB)
            row_ok = row < B
        else:
            row_ok = None

        def and_rows(m):
            return (m & row_ok) if row_ok is not None else m

        # --- Huber(20*log10(pm), tm_db) + CircularLoss(pp, tp), fused pointwise ---
        diff = 20.0 * jnp.log10(pm) - tm_db
        adiff = jnp.abs(diff)
        huber = jnp.where(adiff <= 1.0, 0.5 * diff * diff, adiff - 0.5)
        pointwise = huber + (1.0 - jnp.cos(pp - tp))
        if row_ok is not None:
            # select (not multiply) so NaN/Inf from garbage padded rows cannot leak in
            pointwise = jnp.where(row_ok, pointwise, 0.0)

        # --- magnitude 2nd-order smoothness: centered stencil via XLU rolls ---
        pm_prev = pltpu.roll(pm, shift=1, axis=1)          # pm[i-1] (cyclic)
        pm_next = pltpu.roll(pm, shift=half - 1, axis=1)   # pm[i+1] (cyclic)
        d2 = pm_next - 2.0 * pm + pm_prev                  # valid for 1 <= col <= half-2
        d2_ok = and_rows((col >= 1) & (col <= half - 2))
        smooth = jnp.where(d2_ok, jnp.abs(d2), 0.0) * mag_w

        # --- phase smoothness with wrap rule (matches the torch.where logic) ---
        cd = pltpu.roll(pp, shift=half - 1, axis=1) - pp   # pp[i+1]-pp[i], valid col<=half-2
        cd = jnp.where(jnp.abs(cd) > PI, 2.0 * PI - jnp.abs(cd), cd)
        cd2 = pltpu.roll(cd, shift=half - 1, axis=1) - cd  # valid col<=half-3
        cd2 = jnp.where(jnp.abs(cd2) > PI, 2.0 * PI - jnp.abs(cd2), cd2)
        cd2_ok = and_rows(col <= half - 3)
        smooth = smooth + jnp.where(cd2_ok, jnp.abs(cd2), 0.0) * phase_w

        # Two cross-lane reductions per tile; the means fold into scalar scales.
        partial = (jnp.sum(pointwise, keepdims=True) * inv_pw
                   + jnp.sum(smooth, keepdims=True) * inv_sm)   # (1, 1)

        # Lane-dense aligned output block holding this tile's partial sum.
        out_ref[...] = jnp.zeros_like(out_ref) + partial

    return kernel


def _choose_block_rows(B, C, itemsize, sublane, budget_bytes=2 << 20):
    """Batch-tile rows: ~2 MiB per input block, >=2 tiles for megacore, divisor-friendly."""
    if B <= 2 * sublane:
        return B                                # full batch in one (always-legal) block
    tb = max(sublane, (budget_bytes // (C * itemsize)) // sublane * sublane)
    # At least 2 grid tiles so the "parallel" batch axis can shard across both v7x TCs.
    tb = min(tb, _round_up(-(-B // 2), sublane))
    tb = min(tb, B)
    # Prefer a TB that divides B (drops the tail-row mask) without shrinking >2x.
    if B % tb:
        for cand in range(tb - sublane, sublane - 1, -sublane):
            if B % cand == 0 and 2 * cand >= tb:
                tb = cand
                break
    return tb


def _vmem_cap_bytes():
    """Generation-aware scoped-VMEM cap: <= half physical, <= 64 MiB, fallback 32 MiB."""
    try:
        info = pltpu.get_tpu_info()
        phys = getattr(info, "vmem_capacity_bytes", None)
        if phys:
            return int(min(int(phys) // 2, 64 << 20))
    except Exception:
        pass
    return 32 << 20


def gamma_loss_dB(pred, target, *, mag_smooth_weight=MAG_SMOOTH_WEIGHT,
                  phase_smooth_weight=PHASE_SMOOTH_WEIGHT):
    assert pred.shape == target.shape and pred.ndim == 2 and pred.shape[1] % 2 == 0
    assert pred.dtype == target.dtype
    B, C = pred.shape
    half = C // 2
    assert half >= 3, "smoothness terms require at least 3 frequency points"

    itemsize = jnp.dtype(pred.dtype).itemsize
    sublane = max(8, 32 // itemsize)            # 8 for f32, 16 for bf16, 32 for int8
    TB = _choose_block_rows(B, C, itemsize, sublane)
    G = pl.cdiv(B, TB)

    kernel = _make_kernel(float(mag_smooth_weight), float(phase_smooth_weight),
                          B, TB, half)

    # Stream pred/target whole (no wrapper-side column slices -> no extra HBM copies).
    in_spec = pl.BlockSpec((TB, C), lambda i: (i, 0))
    out_spec = pl.BlockSpec((1, 8, 128), lambda i: (i, 0, 0))

    cost = pl.CostEstimate(
        flops=int(20 * B * C),
        transcendentals=int(B * C),                           # ~one log10/cos per element
        bytes_accessed=int(2 * B * C * itemsize + G * 8 * 128 * 4),
    )
    # Double-buffered inputs + tiny output, headroom; clamp to the per-generation cap.
    req = 2 * 2 * TB * C * itemsize + 2 * (8 * 128 * 4) + (2 << 20)
    vmem_limit = int(min(max(req, 4 << 20), _vmem_cap_bytes()))
    params = pltpu.CompilerParams(
        dimension_semantics=("parallel",),                    # independent per-tile partials
        vmem_limit_bytes=vmem_limit,
    )

    partials = pl.pallas_call(
        kernel,
        grid=(G,),
        out_shape=jax.ShapeDtypeStruct((G, 8, 128), jnp.float32),
        in_specs=[in_spec, in_spec],
        out_specs=out_spec,
        compiler_params=params,
        cost_estimate=cost,
    )(pred, target)

    # Final reduction over the per-tile partial sums (tiny, done in the wrapper).
    # TODO(synk): on single-TC chips (v5e/v6e) a resident accumulator block would
    # drop this tiny extra output; kept as partials so v7x can shard across 2 TCs.
    return jnp.sum(partials[:, 0, 0])


def _reference(pred, target, mag_w=MAG_SMOOTH_WEIGHT, phase_w=PHASE_SMOOTH_WEIGHT):
    # Pure-JAX reference of the PyTorch forward (correctness check).
    half = pred.shape[1] // 2
    pm, pp = pred[:, :half], pred[:, half:]
    tm, tp = target[:, :half], target[:, half:]
    pm_db = 20.0 * jnp.log10(pm)
    d = pm_db - tm
    ad = jnp.abs(d)
    mag_loss = jnp.mean(jnp.where(ad <= 1.0, 0.5 * d * d, ad - 0.5))
    phase_loss = jnp.mean(1.0 - jnp.cos(pp - tp))
    d2 = pm[:, 2:] - 2.0 * pm[:, 1:-1] + pm[:, :-2]
    smooth_mag = mag_w * jnp.mean(jnp.abs(d2))
    cd = pp[:, 1:] - pp[:, :-1]
    cd = jnp.where(jnp.abs(cd) > PI, 2.0 * PI - jnp.abs(cd), cd)
    cd2 = cd[:, 1:] - cd[:, :-1]
    cd2 = jnp.where(jnp.abs(cd2) > PI, 2.0 * PI - jnp.abs(cd2), cd2)
    smooth_phase = phase_w * jnp.mean(jnp.abs(cd2))
    return mag_loss + phase_loss + smooth_mag + smooth_phase


def _make_inputs(key, B, half):
    k1, k2, k3, k4 = jax.random.split(key, 4)
    pred_mag = jax.random.uniform(k1, (B, half), minval=0.05, maxval=1.0)
    pred_phase = jax.random.uniform(k2, (B, half), minval=-PI, maxval=PI)
    tgt_mag_db = jax.random.uniform(k3, (B, half), minval=-25.0, maxval=0.0)
    tgt_phase = jax.random.uniform(k4, (B, half), minval=-PI, maxval=PI)
    pred = jnp.concatenate([pred_mag, pred_phase], axis=1).astype(jnp.float32)
    target = jnp.concatenate([tgt_mag_db, tgt_phase], axis=1).astype(jnp.float32)
    return pred, target


if __name__ == "__main__":
    key = jax.random.PRNGKey(0)

    # Small shape: B=8, 128 frequency points (lane-dense, single tile).
    pred, target = _make_inputs(key, B=8, half=128)
    loss = gamma_loss_dB(pred, target)
    jax.block_until_ready(loss)
    ref = _reference(pred, target)
    assert jnp.allclose(loss, ref, atol=1e-4, rtol=1e-4), (loss, ref)

    # Second shape exercises the multi-tile + tail-row-mask path (B % TB != 0).
    pred2, target2 = _make_inputs(key, B=20, half=128)
    loss2 = gamma_loss_dB(pred2, target2)
    jax.block_until_ready(loss2)
    ref2 = _reference(pred2, target2)
    assert jnp.allclose(loss2, ref2, atol=1e-4, rtol=1e-4), (loss2, ref2)

    print("KERNEL_OK")
</pallas_src>

<mosaic_0001>
module attributes {stable_mosaic.version = 11 : i64} {
  func.func @kernel(%arg0: i32, %arg1: memref<8x256xf32, #tpu.memory_space<vmem>>, %arg2: memref<8x256xf32, #tpu.memory_space<vmem>>, %arg3: memref<1x8x128xf32, #tpu.memory_space<vmem>>) attributes {dimension_semantics = [#tpu.dimension_semantics<parallel>], iteration_bounds = array<i64: 1>, scalar_prefetch = 0 : i64, scratch_operands = 0 : i64, tpu.core_type = #tpu.core_type<tc>, window_params = [{transform_indices = @transform_0, window_bounds = array<i64: 8, 256>}, {transform_indices = @transform_1, window_bounds = array<i64: 8, 256>}, {transform_indices = @transform_2, window_bounds = array<i64: 1, 8, 128>}]} {
    %c0 = arith.constant 0 : index
    %c0_0 = arith.constant 0 : index
    %0 = vector.load %arg1[%c0, %c0_0] : memref<8x256xf32, #tpu.memory_space<vmem>>, vector<8x128xf32>
    %c0_1 = arith.constant 0 : index
    %c128 = arith.constant 128 : index
    %1 = vector.load %arg1[%c0_1, %c128] : memref<8x256xf32, #tpu.memory_space<vmem>>, vector<8x128xf32>
    %c0_2 = arith.constant 0 : index
    %c0_3 = arith.constant 0 : index
    %2 = vector.load %arg2[%c0_2, %c0_3] : memref<8x256xf32, #tpu.memory_space<vmem>>, vector<8x128xf32>
    %c0_4 = arith.constant 0 : index
    %c128_5 = arith.constant 128 : index
    %3 = vector.load %arg2[%c0_4, %c128_5] : memref<8x256xf32, #tpu.memory_space<vmem>>, vector<8x128xf32>
    %4 = tpu.iota {dimensions = array<i32: 1>} : vector<8x128xi32>
    %5 = math.log %0 : vector<8x128xf32>
    %cst = arith.constant 0.434294492 : f32
    %6 = vector.broadcast %cst : f32 to vector<8x128xf32>
    %7 = arith.mulf %5, %6 : vector<8x128xf32>
    %cst_6 = arith.constant 2.000000e+01 : f32
    %8 = vector.broadcast %cst_6 : f32 to vector<8x128xf32>
    %9 = arith.mulf %8, %7 : vector<8x128xf32>
    %10 = arith.subf %9, %2 : vector<8x128xf32>
    %11 = math.absf %10 : vector<8x128xf32>
    %cst_7 = arith.constant 1.000000e+00 : f32
    %12 = vector.broadcast %cst_7 : f32 to vector<8x128xf32>
    %13 = arith.cmpf ole, %11, %12 : vector<8x128xf32>
    %cst_8 = arith.constant 5.000000e-01 : f32
    %14 = vector.broadcast %cst_8 : f32 to vector<8x128xf32>
    %15 = arith.mulf %14, %10 : vector<8x128xf32>
    %16 = arith.mulf %15, %10 : vector<8x128xf32>
    %cst_9 = arith.constant 5.000000e-01 : f32
    %17 = vector.broadcast %cst_9 : f32 to vector<8x128xf32>
    %18 = arith.subf %11, %17 : vector<8x128xf32>
    %19 = arith.select %13, %16, %18 : vector<8x128xi1>, vector<8x128xf32>
    %20 = arith.subf %1, %3 : vector<8x128xf32>
    %21 = math.cos %20 : vector<8x128xf32>
    %cst_10 = arith.constant 1.000000e+00 : f32
    %22 = vector.broadcast %cst_10 : f32 to vector<8x128xf32>
    %23 = arith.subf %22, %21 : vector<8x128xf32>
    %24 = arith.addf %19, %23 : vector<8x128xf32>
    %c1_i32 = arith.constant 1 : i32
    %25 = tpu.dynamic_rotate %0 by %c1_i32 dim 1 : vector<8x128xf32>, i32 -> vector<8x128xf32>
    %c127_i32 = arith.constant 127 : i32
    %26 = tpu.dynamic_rotate %0 by %c127_i32 dim 1 : vector<8x128xf32>, i32 -> vector<8x128xf32>
    %cst_11 = arith.constant 2.000000e+00 : f32
    %27 = vector.broadcast %cst_11 : f32 to vector<8x128xf32>
    %28 = arith.mulf %27, %0 : vector<8x128xf32>
    %29 = arith.subf %26, %28 : vector<8x128xf32>
    %30 = arith.addf %29, %25 : vector<8x128xf32>
    %c1_i32_12 = arith.constant 1 : i32
    %31 = vector.broadcast %c1_i32_12 : i32 to vector<8x128xi32>
    %32 = arith.cmpi sge, %4, %31 : vector<8x128xi32>
    %c126_i32 = arith.constant 126 : i32
    %33 = vector.broadcast %c126_i32 : i32 to vector<8x128xi32>
    %34 = arith.cmpi sle, %4, %33 : vector<8x128xi32>
    %35 = arith.andi %32, %34 : vector<8x128xi1>
    %36 = math.absf %30 : vector<8x128xf32>
    %cst_13 = arith.constant 0.000000e+00 : f32
    %37 = vector.broadcast %cst_13 : f32 to vector<8x128xf32>
    %38 = arith.select %35, %36, %37 : vector<8x128xi1>, vector<8x128xf32>
    %cst_14 = arith.constant 1.000000e-01 : f32
    %39 = vector.broadcast %cst_14 : f32 to vector<8x128xf32>
    %40 = arith.mulf %38, %39 : vector<8x128xf32>
    %c127_i32_15 = arith.constant 127 : i32
    %41 = tpu.dynamic_rotate %1 by %c127_i32_15 dim 1 : vector<8x128xf32>, i32 -> vector<8x128xf32>
    %42 = arith.subf %41, %1 : vector<8x128xf32>
    %43 = math.absf %42 : vector<8x128xf32>
    %cst_16 = arith.constant 3.14159274 : f32
    %44 = vector.broadcast %cst_16 : f32 to vector<8x128xf32>
    %45 = arith.cmpf ogt, %43, %44 : vector<8x128xf32>
    %46 = math.absf %42 : vector<8x128xf32>
    %cst_17 = arith.constant 6.28318548 : f32
    %47 = vector.broadcast %cst_17 : f32 to vector<8x128xf32>
    %48 = arith.subf %47, %46 : vector<8x128xf32>
    %49 = arith.select %45, %48, %42 : vector<8x128xi1>, vector<8x128xf32>
    %c127_i32_18 = arith.constant 127 : i32
    %50 = tpu.dynamic_rotate %49 by %c127_i32_18 dim 1 : vector<8x128xf32>, i32 -> vector<8x128xf32>
    %51 = arith.subf %50, %49 : vector<8x128xf32>
    %52 = math.absf %51 : vector<8x128xf32>
    %cst_19 = arith.constant 3.14159274 : f32
    %53 = vector.broadcast %cst_19 : f32 to vector<8x128xf32>
    %54 = arith.cmpf ogt, %52, %53 : vector<8x128xf32>
    %55 = math.absf %51 : vector<8x128xf32>
    %cst_20 = arith.constant 6.28318548 : f32
    %56 = vector.broadcast %cst_20 : f32 to vector<8x128xf32>
    %57 = arith.subf %56, %55 : vector<8x128xf32>
    %58 = arith.select %54, %57, %51 : vector<8x128xi1>, vector<8x128xf32>
    %c125_i32 = arith.constant 125 : i32
    %59 = vector.broadcast %c125_i32 : i32 to vector<8x128xi32>
    %60 = arith.cmpi sle, %4, %59 : vector<8x128xi32>
    %61 = math.absf %58 : vector<8x128xf32>
    %cst_21 = arith.constant 0.000000e+00 : f32
    %62 = vector.broadcast %cst_21 : f32 to vector<8x128xf32>
    %63 = arith.select %60, %61, %62 : vector<8x128xi1>, vector<8x128xf32>
    %cst_22 = arith.constant 1.000000e-01 : f32
    %64 = vector.broadcast %cst_22 : f32 to vector<8x128xf32>
    %65 = arith.mulf %63, %64 : vector<8x128xf32>
    %66 = arith.addf %40, %65 : vector<8x128xf32>
    %67 = vector.shape_cast %24 : vector<8x128xf32> to vector<1x8x128xf32>
    %cst_23 = arith.constant dense<0.000000e+00> : vector<1xf32>
    %68 = vector.multi_reduction <add>, %67, %cst_23 [1, 2] : vector<1x8x128xf32> to vector<1xf32>
    %69 = vector.shape_cast %68 : vector<1xf32> to vector<1x1x1xf32>
    %70 = vector.extract %69[0, 0, 0] : f32 from vector<1x1x1xf32>
    %71 = vector.broadcast %70 : f32 to vector<1x1xf32>
    %cst_24 = arith.constant 9.765625E-4 : f32
    %72 = vector.broadcast %cst_24 : f32 to vector<1x1xf32>
    %73 = arith.mulf %71, %72 : vector<1x1xf32>
    %74 = vector.shape_cast %66 : vector<8x128xf32> to vector<1x8x128xf32>
    %cst_25 = arith.constant dense<0.000000e+00> : vector<1xf32>
    %75 = vector.multi_reduction <add>, %74, %cst_25 [1, 2] : vector<1x8x128xf32> to vector<1xf32>
    %76 = vector.shape_cast %75 : vector<1xf32> to vector<1x1x1xf32>
    %77 = vector.extract %76[0, 0, 0] : f32 from vector<1x1x1xf32>
    %78 = vector.broadcast %77 : f32 to vector<1x1xf32>
    %cst_26 = arith.constant 9.92063549E-4 : f32
    %79 = vector.broadcast %cst_26 : f32 to vector<1x1xf32>
    %80 = arith.mulf %78, %79 : vector<1x1xf32>
    %81 = arith.addf %73, %80 : vector<1x1xf32>
    %cst_27 = arith.constant 0.000000e+00 : f32
    %82 = vector.broadcast %cst_27 : f32 to vector<1x8x128xf32>
    %83 = vector.shape_cast %81 : vector<1x1xf32> to vector<1x1x1xf32>
    %84 = vector.broadcast %83 : vector<1x1x1xf32> to vector<1x8x128xf32>
    %85 = arith.addf %82, %84 : vector<1x8x128xf32>
    %c0_28 = arith.constant 0 : index
    %c0_29 = arith.constant 0 : index
    %c0_30 = arith.constant 0 : index
    %86 = vector.load %arg3[%c0_28, %c0_29, %c0_30] : memref<1x8x128xf32, #tpu.memory_space<vmem>>, vector<1x8x128xf32>
    tpu.vector_store %arg3[%c0_28, %c0_29, %c0_30], %85 {strides = array<i32>} : memref<1x8x128xf32, #tpu.memory_space<vmem>>, vector<1x8x128xf32>,
    return
  }
  func.func @transform_0(%arg0: i32) -> (i32, i32) {
    %c0_i32 = arith.constant 0 : i32
    %c0_i32_0 = arith.constant 0 : i32
    return %arg0, %c0_i32 : i32, i32
  }
  func.func @transform_1(%arg0: i32) -> (i32, i32) {
    %c0_i32 = arith.constant 0 : i32
    %c0_i32_0 = arith.constant 0 : i32
    return %arg0, %c0_i32 : i32, i32
  }
  func.func @transform_2(%arg0: i32) -> (i32, i32, i32) {
    %c0_i32 = arith.constant 0 : i32
    %c0_i32_0 = arith.constant 0 : i32
    %c0_i32_1 = arith.constant 0 : i32
    return %arg0, %c0_i32, %c0_i32_0 : i32, i32, i32
  }
}

</mosaic_0001>

<llo_original>
// kernel: tpu_custom_call.1
$region0: #{tpu_custom_call.1}
  #allocation0 [shape = 'u32[]', space=smem, size = 0x4, offset = 0x4, fixed_abs, tag = 'smem constant byte address 0x4 - core index']
  #allocation1 [shape = 'u32[144,128]{1,0:T(1,128)}', space=vmem, size = 0x12000, scoped, tag = 'internal scratch']
  %s0 = inlined_call_operand.hbm [shape: f32[8,256], index: 0, kind: input, shape index: {}]
  %s1 = inlined_call_operand.hbm [shape: f32[8,256], index: 1, kind: input, shape index: {}]
  %s2 = inlined_call_operand.hbm [shape: f32[1,8,128], index: 2, kind: output, shape index: {}]
  %s3 = sld [smem:[#allocation0]]
  $region26: #{tpu_custom_call.1} parent=0
    _
  %s5 = ssub.s32 1, %s3
  %s6 = scalar_select 0, %s5, %s3
  $region1: #{tpu_custom_call.1} parent=0
    #allocation2 [shape = 'u8[8192]{0}', space=vmem, size = 0x2000, scoped, tag = 'input window, operand 0, single buffered']
    #allocation3 [shape = 's32[1]{0}', space=sflag, size = 0x4, scoped, tag = 'scoped memory for tpu_custom_call.1']
    #allocation4 [shape = 's32[1]{0}', space=sflag, size = 0x4, scoped, tag = 'scoped memory for tpu_custom_call.1']
    #allocation5 [shape = 'u8[8192]{0}', space=vmem, size = 0x2000, scoped, tag = 'input window, operand 1, single buffered']
    #allocation6 [shape = 's32[1]{0}', space=sflag, size = 0x4, scoped, tag = 'scoped memory for tpu_custom_call.1']
    #allocation7 [shape = 'u8[4096]{0}', space=vmem, size = 0x1000, scoped, tag = 'output window, operand 0, single buffered']
    %7 = vsyncpa [#allocation3], 0
    %8 = vsyncpa [#allocation6], 0
    %9 = vsyncpa [#allocation4], 0
    // Predicated region
    $region2: #{tpu_custom_call.1} parent=1 // pred_check
      _
    $region3: #{tpu_custom_call.1} parent=1 // pred_check_branch
      %11 = sbr.rel (0) target = $region5
    $region4: #{tpu_custom_call.1} parent=1 // pred_region
      %s13 = ssub.s32 256, 256
      %14 = vsyncadd [#allocation3], %s13
      %s16 = sshll.u32 [#allocation2], 4
      %s17 = int_to_ptr.vmem [resolvable:$true] %s16
      %19 = dma.hbm_to_vmem [thread:$0]  %s0, 256, %s17, [#allocation3]
    $region5: #{tpu_custom_call.1} parent=1 // pred_fallthru
      _
    // Predicated region
    $region6: #{tpu_custom_call.1} parent=1 // pred_check
      _
    $region7: #{tpu_custom_call.1} parent=1 // pred_check_branch
      %21 = sbr.rel (0) target = $region9
    $region8: #{tpu_custom_call.1} parent=1 // pred_region
      %s23 = ssub.s32 256, 256
      %24 = vsyncadd [#allocation6], %s23
      %s26 = sshll.u32 [#allocation5], 4
      %s27 = int_to_ptr.vmem [resolvable:$true] %s26
      %29 = dma.hbm_to_vmem [thread:$0]  %s1, 256, %s27, [#allocation6]
    $region9: #{tpu_custom_call.1} parent=1 // pred_fallthru
      _
    // Predicated region
    $region10: #{tpu_custom_call.1} parent=1 // pred_check
      _
    $region11: #{tpu_custom_call.1} parent=1 // pred_check_branch
      %31 = sbr.rel (0) target = $region13
    $region12: #{tpu_custom_call.1} parent=1 // pred_region
      %32 = dma.done [#allocation3], 256
    $region13: #{tpu_custom_call.1} parent=1 // pred_fallthru
      _
    // Predicated region
    $region14: #{tpu_custom_call.1} parent=1 // pred_check
      _
    $region15: #{tpu_custom_call.1} parent=1 // pred_check_branch
      %34 = sbr.rel (0) target = $region17
    $region16: #{tpu_custom_call.1} parent=1 // pred_region
      %35 = dma.done [#allocation6], 256
    $region17: #{tpu_custom_call.1} parent=1 // pred_fallthru
      _
    %v36 = vld [vmem:[#allocation2] sm:$0xff]
    %v37 = vld [vmem:[#allocation2 + $0x8] sm:$0xff]
    %v38 = vld [vmem:[#allocation5] sm:$0xff]
    %v39 = vld [vmem:[#allocation5 + $0x8] sm:$0xff]
    %v40 = vlaneseq
    %v41 = vand.u32 %v40, 127
    %v42 = vlog2.pop %v36
    %v43 = vmul.f32 %v42, 0.6931472
    %v44 = vmul.f32 %v43, 0.4342945
    %v45 = vmul.f32 %v44, 20.0
    %v46 = vsub.f32 %v45, %v38
    %v47 = vand.u32 2147483647, %v46
    %vm48 = vcmp.le.f32.partialorder %v47, 1.0
    %v49 = vmul.f32 %v46, 0.5
    %v50 = vmul.f32 %v49, %v46
    %v51 = vsub.f32 %v47, 0.5
    %v52 = vsel %vm48, %v50, %v51
    %v53 = vsub.f32 %v37, %v39
    %v54 = vand.u32 2147483647, %v53
    %vm55 = vcmp.le.f32.partialorder %v54, 0.7853982
    %vm56 = vcmp.lt.s32.totalorder %v53, 0
    %v57 = vand.u32 %v53, 2139095040
    %v58 = vshrl.u32 %v57, 23
    %v59 = vsub.s32 %v58, 127
    %v60 = vand.u32 2147483647, %v53
    %v61 = vand.u32 %v60, 8388607
    %v62 = vor.u32 %v61, 8388608
    %v63 = vsub.s32 0, %v62
    %v64 = vadd.s32 %v59, 1
    %vm65 = vcmp.gt.s32.totalorder %v64, 0
    %v66 = vsel %vm65, %v64, 0
    %v67 = vshrl.u32 %v66, 5
    %v68 = vand.u32 %v66, 31
    %v69 = vsub.s32 32, %v68
    %v70 = vshrl.u32 683565275, %v69
    %v71 = vshll.u32 683565275, %v68
    %v72 = vshrl.u32 2475754826, %v69
    %v73 = vor.u32 %v71, %v72
    %v74 = vshll.u32 2475754826, %v68
    %v75 = vshrl.u32 2131351028, %v69
    %v76 = vor.u32 %v74, %v75
    %v77 = vshll.u32 2131351028, %v68
    %v78 = vshrl.u32 2102212464, %v69
    %v79 = vor.u32 %v77, %v78
    %v80 = vshll.u32 2102212464, %v68
    %v81 = vshrl.u32 920167782, %v69
    %v82 = vor.u32 %v80, %v81
    %v83 = vshll.u32 920167782, %v68
    %v84 = vshrl.u32 1326507024, %v69
    %v85 = vor.u32 %v83, %v84
    %vm86 = vcmp.lt.s32.totalorder %v67, 1
    %vm87 = vcmp.lt.s32.totalorder %v67, 2
    %vm88 = vcmp.lt.s32.totalorder %v67, 3
    %vm89 = vcmp.lt.s32.totalorder %v67, 4
    %v90 = vsel %vm86, %v70, %v73
    %v91 = vsel %vm89, %v79, 2102212464
    %v92 = vsel %vm88, %v76, %v91
    %v93 = vsel %vm87, %v90, %v92
    %v94 = vsel %vm86, %v73, %v76
    %v95 = vsel %vm89, %v82, 920167782
    %v96 = vsel %vm88, %v79, %v95
    %v97 = vsel %vm87, %v94, %v96
    %v98 = vsel %vm86, %v76, %v79
    %v99 = vsel %vm89, %v85, 1326507024
    %v100 = vsel %vm88, %v82, %v99
    %v101 = vsel %vm87, %v98, %v100
    %v102 = vshll.u32 %v62, 8
    %v103 = vmul.u32.u64.compose %v102, %v101
    %v104 = vextract.low.u32 %v103
    %v105 = vextract.high.u32 %v103
    %v106 = vmul.u32.u64.compose %v102, %v97
    %v107 = vextract.low.u32 %v106
    %v108 = vextract.high.u32 %v106
    %v109 = vmul.u32 %v102, %v93
    %v110 = vadd.s32 %v105, %v107
    %vm111 = vc.u32 %v105, %v107
    %v112 = vadd.s32 %v108, 1
    %v113 = vsel %vm111, %v112, %v108
    %v114 = vadd.s32 %v109, %v113
    %v115 = vadd.s32 %v114, 536870912
    %v116 = vshrl.u32 %v115, 30
    %v117 = vshll.u32 %v116, 30
    %v118 = vsub.s32 %v114, %v117
    %vm119 = vcmp.lt.s32.totalorder %v118, 0
    %v120 = vsub.s32 0, %v118
    %v121 = vsel %vm119, %v120, %v118
    %v122 = vclz %v121
    %v123 = vsub.s32 %v122, 2
    %vm124 = vcmp.gt.s32.totalorder 0, %v123
    %v125 = vsel %vm124, 0, %v123
    %v126 = vsub.s32 32, %v125
    %v127 = vshll.u32 %v118, %v125
    %v128 = vshrl.u32 %v110, %v126
    %v129 = vor.u32 %v127, %v128
    %v130 = vsub.s32 4294967266, %v125
    %v131 = vadd.s32 %v130, 127
    %v132 = vshll.u32 %v131, 23
    %v133 = vor.u32 4788187, %v132
    %v134 = vand.u32 2147483647, %v133
    %v136 = vcvt.s32.f32 %v129
    %v137 = vmul.f32 %v136, %v134
    %v138 = vxor.u32 %v137, 2147483648
    %v139 = vsel %vm56, %v138, %v137
    %v140 = vsub.s32 4, %v116
    %v141 = vsel %vm56, %v140, %v116
    %v142 = vsel %vm55, %v53, %v139
    %v143 = vsel %vm55, 0, %v141
    %v144 = vcosq.f32.pop %v142
    %v145 = vsinq.f32.pop %v142
    %vm146 = vweird.f32 %v53
    %v147 = vand.u32 %v143, 3
    %vm148 = vcmp.lt.s32.totalorder %v147, 2
    %vm149 = vcmp.eq.s32.totalorder %v147, 0
    %v150 = vxor.u32 %v145, 2147483648
    %v151 = vsel %vm149, %v144, %v150
    %vm152 = vcmp.eq.s32.totalorder %v147, 2
    %v153 = vxor.u32 %v144, 2147483648
    %v154 = vsel %vm152, %v153, %v145
    %v155 = vsel %vm148, %v151, %v154
    %v156 = vsel %vm146, nan, %v155
    %v157 = vsub.f32 1.0, %v156
    %v158 = vadd.f32 %v52, %v157
    %159 = vrot.lane.b32.xlu0 %v36, 1
    %v160 = vpop.permute.xlu0 %159
    %161 = vrot.lane.b32.xlu0 %v36, 127
    %v162 = vpop.permute.xlu0 %161
    %v163 = vmul.f32 %v36, 2.0
    %v164 = vsub.f32 %v162, %v163
    %v165 = vadd.f32 %v164, %v160
    %vm166 = vcmp.ge.s32.totalorder %v41, 1
    %vm167 = vcmp.le.s32.totalorder %v41, 126
    %vm168 = vmand %vm166, %vm167
    %v169 = vand.u32 2147483647, %v165
    %v170 = vsel %vm168, %v169, 0.0
    %v171 = vmul.f32 %v170, 0.1
    %172 = vrot.lane.b32.xlu0 %v37, 127
    %v173 = vpop.permute.xlu0 %172
    %v174 = vsub.f32 %v173, %v37
    %v175 = vand.u32 2147483647, %v174
    %vm176 = vcmp.gt.f32.partialorder %v175, 3.1415927
    %v177 = vsub.f32 6.2831855, %v175
    %v178 = vsel %vm176, %v177, %v174
    %179 = vrot.lane.b32.xlu0 %v178, 127
    %v180 = vpop.permute.xlu0 %179
    %v181 = vsub.f32 %v180, %v178
    %v182 = vand.u32 2147483647, %v181
    %vm183 = vcmp.gt.f32.partialorder %v182, 3.1415927
    %v184 = vsub.f32 6.2831855, %v182
    %v185 = vsel %vm183, %v184, %v181
    %vm186 = vcmp.le.s32.totalorder %v41, 125
    %v187 = vand.u32 2147483647, %v185
    %v188 = vsel %vm186, %v187, 0.0
    %v189 = vmul.f32 %v188, 0.1
    %v190 = vadd.f32 %v171, %v189
    %191 = vadd.xlane.f32.xlu0 %v158
    %v192 = vpop.xlane.xlu0 %191
    %v193 = vrot.slane %v192, 4
    %v194 = vadd.f32 %v192, %v193
    %v195 = vrot.slane %v194, 2
    %v196 = vadd.f32 %v194, %v195
    %v197 = vrot.slane %v196, 1
    %v198 = vadd.f32 %v196, %v197
    %s199 = vtos %v198
    %v200 = vstv %s199
    %v201 = vmul.f32 %v200, 0.0009765625
    %202 = vadd.xlane.f32.xlu0 %v190
    %v203 = vpop.xlane.xlu0 %202
    %v204 = vrot.slane %v203, 4
    %v205 = vadd.f32 %v203, %v204
    %v206 = vrot.slane %v205, 2
    %v207 = vadd.f32 %v205, %v206
    %v208 = vrot.slane %v207, 1
    %v209 = vadd.f32 %v207, %v208
    %s210 = vtos %v209
    %v211 = vstv %s210
    %v212 = vmul.f32 %v211, 0.0009920635
    %v213 = vadd.f32 %v201, %v212
    %v214 = vadd.f32 %v213, 0.0
    %215 = vst [vmem:[#allocation7] sm:$0xff] %v214
    // Predicated region
    $region18: #{tpu_custom_call.1} parent=1 // pred_check
      _
    $region19: #{tpu_custom_call.1} parent=1 // pred_check_branch
      %217 = sbr.rel (0) target = $region21
    $region20: #{tpu_custom_call.1} parent=1 // pred_region
      %s219 = ssub.s32 128, 128
      %220 = vsyncadd [#allocation4], %s219
      %s222 = sshll.u32 [#allocation7], 4
      %s223 = int_to_ptr.vmem [resolvable:$true] %s222
      %225 = dma.vmem_to_hbm [thread:$0]  %s223, 128, %s2, [#allocation4]
    $region21: #{tpu_custom_call.1} parent=1 // pred_fallthru
      _
    // Predicated region
    $region22: #{tpu_custom_call.1} parent=1 // pred_check
      _
    $region23: #{tpu_custom_call.1} parent=1 // pred_check_branch
      %227 = sbr.rel (0) target = $region25
    $region24: #{tpu_custom_call.1} parent=1 // pred_region
      %228 = dma.done [#allocation4], 128
    $region25: #{tpu_custom_call.1} parent=1 // pred_fallthru
      _
    %229 = vsyncpa [#allocation3], 1
    %230 = vsyncpa [#allocation6], 1
    %231 = vsyncpa [#allocation4], 1

</llo_original>
